<compile_context>
chip_gen: v7x
topology: tpu7x:2x2x1
jax: 0.10.0
libtpu: 0.0.40
codegen_flags: <defaults>
</compile_context>

<pallas_src>
import functools

import jax
import jax.numpy as jnp
from jax.experimental import pallas as pl
from jax.experimental.pallas import tpu as pltpu

LANE = 128
SUBLANE = 8


def _round_up(x, m):
    return (x + m - 1) // m * m


def _pad2d(a, shape):
    return jnp.pad(a, [(0, s - d) for d, s in zip(a.shape, shape)])


def vae_kernel(x_ref,
               w1_ref, b1_ref,        # encoder.linear1   [in_p,  lat_p], [1, lat_p]
               w23_ref, b23_ref,      # fused linear2|3   [lat_p, 2*lat_p], [1, 2*lat_p]
               wd1_ref, bd1_ref,      # decoder.hidden    [lat_p, lat_p], [1, lat_p]
               wd2_ref, bd2_ref,      # decoder.output    [lat_p, in_p],  [1, in_p]
               noise_ref,             # N(0,1) sample     [TB, lat_p]
               out_ref,               # reconstruction    [TB, in_p]
               kl_ref,                # per-tile KL partial, (1, 1)
               *, lat_p, tb, batch):
    # ---- encoder ----
    h = jnp.dot(x_ref[...], w1_ref[...], preferred_element_type=jnp.float32) + b1_ref[...]
    h = jnp.maximum(h, 0.0)                                            # relu

    # fused mu / log_sigma heads: one MXU call, lane-aligned static slices
    y = jnp.dot(h, w23_ref[...], preferred_element_type=jnp.float32) + b23_ref[...]
    mu = y[:, :lat_p]
    log_sigma = y[:, lat_p:]
    sigma = jnp.exp(log_sigma)

    # reparameterization: z = mu + sigma * eps   (padded lanes: 0 + 1*0 = 0)
    z = mu + sigma * noise_ref[...]

    # kl = sum(sigma^2 + mu^2 - 2*log_sigma - 1); padded lanes contribute exactly 0
    kl_terms = sigma * sigma + mu * mu - 2.0 * log_sigma - 1.0
    kl_rows = jnp.sum(kl_terms, axis=1, keepdims=True)                 # (TB, 1)
    if batch % tb != 0:
        # mask padded batch rows (bias makes them nonzero) out of the KL sum
        rows = pl.program_id(0) * tb + jax.lax.broadcasted_iota(jnp.int32, (tb, 1), 0)
        kl_rows = jnp.where(rows < batch, kl_rows, 0.0)
    kl_ref[...] = jnp.sum(kl_rows, axis=0, keepdims=True)              # (1, 1)

    # ---- decoder ----
    a = jnp.dot(z, wd1_ref[...], preferred_element_type=jnp.float32) + bd1_ref[...]
    a = jnp.maximum(a, 0.0)                                            # relu
    out_ref[...] = jnp.dot(a, wd2_ref[...], preferred_element_type=jnp.float32) + bd2_ref[...]


def vae_forward(x, params, noise, *, tile_b=256):
    """x: [B, input_shape] f32; noise: [B, latent_dim] f32 -> (recon [B, in], kl scalar)."""
    B, in_dim = x.shape
    lat = noise.shape[1]

    in_p = _round_up(in_dim, LANE)
    lat_p = _round_up(lat, LANE)
    # Batch tile: sublane-aligned; tile_b=256 keeps double-buffered tiles + resident
    # weights comfortably inside v7x's 64 MiB VMEM (and the 32 MiB scoped default).
    tb = min(tile_b, _round_up(B, SUBLANE))
    bp = _round_up(B, tb)
    n_tiles = bp // tb

    # --- lane-dense padding (zero pad is exact: see kernel comments) ---
    x_p = _pad2d(x, (bp, in_p))
    noise_p = _pad2d(noise, (bp, lat_p))

    w1 = _pad2d(params["w1"], (in_p, lat_p));   b1 = _pad2d(params["b1"], (1, lat_p))
    w23 = jnp.concatenate([_pad2d(params["w2"], (lat_p, lat_p)),
                           _pad2d(params["w3"], (lat_p, lat_p))], axis=1)
    b23 = jnp.concatenate([_pad2d(params["b2"], (1, lat_p)),
                           _pad2d(params["b3"], (1, lat_p))], axis=1)
    wd1 = _pad2d(params["wd1"], (lat_p, lat_p)); bd1 = _pad2d(params["bd1"], (1, lat_p))
    wd2 = _pad2d(params["wd2"], (lat_p, in_p));  bd2 = _pad2d(params["bd2"], (1, in_p))

    # weights: constant block index -> fetched once, VMEM-resident across the grid
    full = lambda shape: pl.BlockSpec(shape, lambda i: (0, 0))
    batched = lambda shape: pl.BlockSpec(shape, lambda i: (i, 0))

    flops = 2 * B * (2 * in_dim * lat + 3 * lat * lat)
    bytes_accessed = sum(int(a.size) * 4 for a in
                         (x_p, noise_p, w1, b1, w23, b23, wd1, bd1, wd2, bd2))
    bytes_accessed += int(bp * in_p) * 4 + n_tiles * 4

    kernel = functools.partial(vae_kernel, lat_p=lat_p, tb=tb, batch=B)

    recon_p, kl_tiles = pl.pallas_call(
        kernel,
        grid=(n_tiles,),
        in_specs=[
            batched((tb, in_p)),                 # x
            full((in_p, lat_p)), full((1, lat_p)),        # w1, b1
            full((lat_p, 2 * lat_p)), full((1, 2 * lat_p)),  # w23, b23
            full((lat_p, lat_p)), full((1, lat_p)),       # wd1, bd1
            full((lat_p, in_p)), full((1, in_p)),         # wd2, bd2
            batched((tb, lat_p)),                # noise
        ],
        out_specs=(
            batched((tb, in_p)),                                   # reconstruction
            pl.BlockSpec((None, 1, 1), lambda i: (i, 0, 0)),       # per-tile KL partial
        ),
        out_shape=(
            jax.ShapeDtypeStruct((bp, in_p), jnp.float32),
            jax.ShapeDtypeStruct((n_tiles, 1, 1), jnp.float32),
        ),
        compiler_params=pltpu.CompilerParams(dimension_semantics=("parallel",)),
        cost_estimate=pl.CostEstimate(flops=flops,
                                      transcendentals=B * lat,
                                      bytes_accessed=bytes_accessed),
    )(x_p, w1, b1, w23, b23, wd1, bd1, wd2, bd2, noise_p)

    return recon_p[:B, :in_dim], jnp.sum(kl_tiles)


def init_params(key, input_shape, latent_dim):
    ks = jax.random.split(key, 10)

    def lin(kw, kb, fan_in, fan_out):
        bound = 1.0 / jnp.sqrt(fan_in)
        w = jax.random.uniform(kw, (fan_in, fan_out), jnp.float32, -bound, bound)
        b = jax.random.uniform(kb, (1, fan_out), jnp.float32, -bound, bound)
        return w, b

    p = {}
    p["w1"],  p["b1"]  = lin(ks[0], ks[1], input_shape, latent_dim)   # encoder.linear1
    p["w2"],  p["b2"]  = lin(ks[2], ks[3], latent_dim, latent_dim)    # encoder.linear2 (mu)
    p["w3"],  p["b3"]  = lin(ks[4], ks[5], latent_dim, latent_dim)    # encoder.linear3 (log_sigma)
    p["wd1"], p["bd1"] = lin(ks[6], ks[7], latent_dim, latent_dim)    # decoder.hidden_layer
    p["wd2"], p["bd2"] = lin(ks[8], ks[9], latent_dim, input_shape)   # decoder.output_layer
    return p


def reference_forward(x, p, noise):
    h = jnp.maximum(x @ p["w1"] + p["b1"], 0.0)
    mu = h @ p["w2"] + p["b2"]
    log_sigma = h @ p["w3"] + p["b3"]
    sigma = jnp.exp(log_sigma)
    z = mu + sigma * noise
    kl = jnp.sum(sigma ** 2 + mu ** 2 - 2.0 * log_sigma - 1.0)   # matches the PyTorch module
    a = jnp.maximum(z @ p["wd1"] + p["bd1"], 0.0)
    return a @ p["wd2"] + p["bd2"], kl


if __name__ == "__main__":
    key = jax.random.PRNGKey(0)
    k_param, k_x, k_noise = jax.random.split(key, 3)

    batch = 8
    input_shape = 16   # VAE(input_shape=16, latent_dim=8)
    latent_dim = 8

    params = init_params(k_param, input_shape, latent_dim)
    x = jax.random.normal(k_x, (batch, input_shape), jnp.float32)
    # torch.distributions.Normal(0,1).sample(mu.shape) -> supplied explicitly
    noise = jax.random.normal(k_noise, (batch, latent_dim), jnp.float32)

    recon, kl = vae_forward(x, params, noise)
    recon = jax.block_until_ready(recon)
    kl = jax.block_until_ready(kl)

    ref_recon, ref_kl = reference_forward(x, params, noise)
    assert jnp.allclose(recon, ref_recon, atol=1e-5, rtol=1e-5), "reconstruction mismatch"
    assert jnp.allclose(kl, ref_kl, atol=1e-4, rtol=1e-5), "kl mismatch"

    print("KERNEL_OK")
</pallas_src>

<mosaic_0001>
module attributes {stable_mosaic.version = 11 : i64} {
  func.func @vae_kernel(%arg0: i32, %arg1: memref<8x128xf32, #tpu.memory_space<vmem>>, %arg2: memref<128x128xf32, #tpu.memory_space<vmem>>, %arg3: memref<1x128xf32, #tpu.memory_space<vmem>>, %arg4: memref<128x256xf32, #tpu.memory_space<vmem>>, %arg5: memref<1x256xf32, #tpu.memory_space<vmem>>, %arg6: memref<128x128xf32, #tpu.memory_space<vmem>>, %arg7: memref<1x128xf32, #tpu.memory_space<vmem>>, %arg8: memref<128x128xf32, #tpu.memory_space<vmem>>, %arg9: memref<1x128xf32, #tpu.memory_space<vmem>>, %arg10: memref<8x128xf32, #tpu.memory_space<vmem>>, %arg11: memref<8x128xf32, #tpu.memory_space<vmem>>, %arg12: memref<1x1x1xf32, #tpu.memory_space<vmem>>) attributes {dimension_semantics = [#tpu.dimension_semantics<parallel>], iteration_bounds = array<i64: 1>, scalar_prefetch = 0 : i64, scratch_operands = 0 : i64, tpu.core_type = #tpu.core_type<tc>, window_params = [{transform_indices = @transform_0, window_bounds = array<i64: 8, 128>}, {pipeline_mode = #tpu.pipeline_mode<synchronous>, transform_indices = @transform_1, window_bounds = array<i64: 128, 128>}, {pipeline_mode = #tpu.pipeline_mode<synchronous>, transform_indices = @transform_2, window_bounds = array<i64: 1, 128>}, {pipeline_mode = #tpu.pipeline_mode<synchronous>, transform_indices = @transform_3, window_bounds = array<i64: 128, 256>}, {pipeline_mode = #tpu.pipeline_mode<synchronous>, transform_indices = @transform_4, window_bounds = array<i64: 1, 256>}, {pipeline_mode = #tpu.pipeline_mode<synchronous>, transform_indices = @transform_5, window_bounds = array<i64: 128, 128>}, {pipeline_mode = #tpu.pipeline_mode<synchronous>, transform_indices = @transform_6, window_bounds = array<i64: 1, 128>}, {pipeline_mode = #tpu.pipeline_mode<synchronous>, transform_indices = @transform_7, window_bounds = array<i64: 128, 128>}, {pipeline_mode = #tpu.pipeline_mode<synchronous>, transform_indices = @transform_8, window_bounds = array<i64: 1, 128>}, {transform_indices = @transform_9, window_bounds = array<i64: 8, 128>}, {transform_indices = @transform_10, window_bounds = array<i64: 8, 128>}, {transform_indices = @transform_11, window_bounds = array<i64: 1, 1, 1>}]} {
    %c0 = arith.constant 0 : index
    %c0_0 = arith.constant 0 : index
    %0 = vector.load %arg1[%c0, %c0_0] : memref<8x128xf32, #tpu.memory_space<vmem>>, vector<8x128xf32>
    %c0_1 = arith.constant 0 : index
    %c0_2 = arith.constant 0 : index
    %1 = vector.load %arg2[%c0_1, %c0_2] : memref<128x128xf32, #tpu.memory_space<vmem>>, vector<128x128xf32>
    %cst = arith.constant dense<0.000000e+00> : vector<8x128xf32>
    %2 = tpu.matmul %0, %1, %cst {dimension_numbers = #tpu.dot_dimension_numbers<[1], [0], [0], [1], [0, 0, 1, 1], [], []>} : vector<8x128xf32>, vector<128x128xf32>, vector<8x128xf32> -> vector<8x128xf32>
    %c0_3 = arith.constant 0 : index
    %c0_4 = arith.constant 0 : index
    %3 = vector.load %arg3[%c0_3, %c0_4] : memref<1x128xf32, #tpu.memory_space<vmem>>, vector<1x128xf32>
    %4 = vector.broadcast %3 : vector<1x128xf32> to vector<8x128xf32>
    %5 = arith.addf %2, %4 : vector<8x128xf32>
    %cst_5 = arith.constant 0.000000e+00 : f32
    %6 = vector.broadcast %cst_5 : f32 to vector<8x128xf32>
    %7 = arith.maximumf %5, %6 : vector<8x128xf32>
    %c0_6 = arith.constant 0 : index
    %c0_7 = arith.constant 0 : index
    %8 = vector.load %arg4[%c0_6, %c0_7] : memref<128x256xf32, #tpu.memory_space<vmem>>, vector<128x256xf32>
    %cst_8 = arith.constant dense<0.000000e+00> : vector<8x256xf32>
    %9 = tpu.matmul %7, %8, %cst_8 {dimension_numbers = #tpu.dot_dimension_numbers<[1], [0], [0], [1], [0, 0, 1, 1], [], []>} : vector<8x128xf32>, vector<128x256xf32>, vector<8x256xf32> -> vector<8x256xf32>
    %c0_9 = arith.constant 0 : index
    %c0_10 = arith.constant 0 : index
    %10 = vector.load %arg5[%c0_9, %c0_10] : memref<1x256xf32, #tpu.memory_space<vmem>>, vector<1x256xf32>
    %11 = vector.broadcast %10 : vector<1x256xf32> to vector<8x256xf32>
    %12 = arith.addf %9, %11 : vector<8x256xf32>
    %13 = vector.extract_strided_slice %12 {offsets = [0, 0], sizes = [8, 128], strides = [1, 1]} : vector<8x256xf32> to vector<8x128xf32>
    %14 = vector.extract_strided_slice %12 {offsets = [0, 128], sizes = [8, 128], strides = [1, 1]} : vector<8x256xf32> to vector<8x128xf32>
    %15 = math.exp %14 : vector<8x128xf32>
    %c0_11 = arith.constant 0 : index
    %c0_12 = arith.constant 0 : index
    %16 = vector.load %arg10[%c0_11, %c0_12] : memref<8x128xf32, #tpu.memory_space<vmem>>, vector<8x128xf32>
    %17 = arith.mulf %15, %16 : vector<8x128xf32>
    %18 = arith.addf %13, %17 : vector<8x128xf32>
    %19 = arith.mulf %15, %15 : vector<8x128xf32>
    %20 = arith.mulf %13, %13 : vector<8x128xf32>
    %21 = arith.addf %19, %20 : vector<8x128xf32>
    %cst_13 = arith.constant 2.000000e+00 : f32
    %22 = vector.broadcast %cst_13 : f32 to vector<8x128xf32>
    %23 = arith.mulf %22, %14 : vector<8x128xf32>
    %24 = arith.subf %21, %23 : vector<8x128xf32>
    %cst_14 = arith.constant 1.000000e+00 : f32
    %25 = vector.broadcast %cst_14 : f32 to vector<8x128xf32>
    %26 = arith.subf %24, %25 : vector<8x128xf32>
    %cst_15 = arith.constant dense<0.000000e+00> : vector<8xf32>
    %27 = vector.multi_reduction <add>, %26, %cst_15 [1] : vector<8x128xf32> to vector<8xf32>
    %28 = vector.shape_cast %27 : vector<8xf32> to vector<8x1xf32>
    %cst_16 = arith.constant dense<0.000000e+00> : vector<1xf32>
    %29 = vector.multi_reduction <add>, %28, %cst_16 [0] : vector<8x1xf32> to vector<1xf32>
    %30 = vector.shape_cast %29 : vector<1xf32> to vector<1x1xf32>
    %c0_17 = arith.constant 0 : index
    %c0_18 = arith.constant 0 : index
    %c0_19 = arith.constant 0 : index
    %31 = vector.load %arg12[%c0_17, %c0_18, %c0_19] : memref<1x1x1xf32, #tpu.memory_space<vmem>>, vector<1x1x1xf32>
    %32 = vector.shape_cast %31 : vector<1x1x1xf32> to vector<1x1xf32>
    %33 = vector.shape_cast %30 : vector<1x1xf32> to vector<1x1x1xf32>
    tpu.vector_store %arg12[%c0_17, %c0_18, %c0_19], %33 {strides = array<i32>} : memref<1x1x1xf32, #tpu.memory_space<vmem>>, vector<1x1x1xf32>,
    %c0_20 = arith.constant 0 : index
    %c0_21 = arith.constant 0 : index
    %34 = vector.load %arg6[%c0_20, %c0_21] : memref<128x128xf32, #tpu.memory_space<vmem>>, vector<128x128xf32>
    %cst_22 = arith.constant dense<0.000000e+00> : vector<8x128xf32>
    %35 = tpu.matmul %18, %34, %cst_22 {dimension_numbers = #tpu.dot_dimension_numbers<[1], [0], [0], [1], [0, 0, 1, 1], [], []>} : vector<8x128xf32>, vector<128x128xf32>, vector<8x128xf32> -> vector<8x128xf32>
    %c0_23 = arith.constant 0 : index
    %c0_24 = arith.constant 0 : index
    %36 = vector.load %arg7[%c0_23, %c0_24] : memref<1x128xf32, #tpu.memory_space<vmem>>, vector<1x128xf32>
    %37 = vector.broadcast %36 : vector<1x128xf32> to vector<8x128xf32>
    %38 = arith.addf %35, %37 : vector<8x128xf32>
    %cst_25 = arith.constant 0.000000e+00 : f32
    %39 = vector.broadcast %cst_25 : f32 to vector<8x128xf32>
    %40 = arith.maximumf %38, %39 : vector<8x128xf32>
    %c0_26 = arith.constant 0 : index
    %c0_27 = arith.constant 0 : index
    %41 = vector.load %arg8[%c0_26, %c0_27] : memref<128x128xf32, #tpu.memory_space<vmem>>, vector<128x128xf32>
    %cst_28 = arith.constant dense<0.000000e+00> : vector<8x128xf32>
    %42 = tpu.matmul %40, %41, %cst_28 {dimension_numbers = #tpu.dot_dimension_numbers<[1], [0], [0], [1], [0, 0, 1, 1], [], []>} : vector<8x128xf32>, vector<128x128xf32>, vector<8x128xf32> -> vector<8x128xf32>
    %c0_29 = arith.constant 0 : index
    %c0_30 = arith.constant 0 : index
    %43 = vector.load %arg9[%c0_29, %c0_30] : memref<1x128xf32, #tpu.memory_space<vmem>>, vector<1x128xf32>
    %44 = vector.broadcast %43 : vector<1x128xf32> to vector<8x128xf32>
    %45 = arith.addf %42, %44 : vector<8x128xf32>
    %c0_31 = arith.constant 0 : index
    %c0_32 = arith.constant 0 : index
    %46 = vector.load %arg11[%c0_31, %c0_32] : memref<8x128xf32, #tpu.memory_space<vmem>>, vector<8x128xf32>
    tpu.vector_store %arg11[%c0_31, %c0_32], %45 {strides = array<i32>} : memref<8x128xf32, #tpu.memory_space<vmem>>, vector<8x128xf32>,
    return
  }
  func.func @transform_0(%arg0: i32) -> (i32, i32) {
    %c0_i32 = arith.constant 0 : i32
    %c0_i32_0 = arith.constant 0 : i32
    return %arg0, %c0_i32 : i32, i32
  }
  func.func @transform_1(%arg0: i32) -> (i32, i32) {
    %c0_i32 = arith.constant 0 : i32
    %c0_i32_0 = arith.constant 0 : i32
    %c0_i32_1 = arith.constant 0 : i32
    return %c0_i32, %c0_i32_0 : i32, i32
  }
  func.func @transform_2(%arg0: i32) -> (i32, i32) {
    %c0_i32 = arith.constant 0 : i32
    %c0_i32_0 = arith.constant 0 : i32
    %c0_i32_1 = arith.constant 0 : i32
    return %c0_i32, %c0_i32_0 : i32, i32
  }
  func.func @transform_3(%arg0: i32) -> (i32, i32) {
    %c0_i32 = arith.constant 0 : i32
    %c0_i32_0 = arith.constant 0 : i32
    %c0_i32_1 = arith.constant 0 : i32
    return %c0_i32, %c0_i32_0 : i32, i32
  }
  func.func @transform_4(%arg0: i32) -> (i32, i32) {
    %c0_i32 = arith.constant 0 : i32
    %c0_i32_0 = arith.constant 0 : i32
    %c0_i32_1 = arith.constant 0 : i32
    return %c0_i32, %c0_i32_0 : i32, i32
  }
  func.func @transform_5(%arg0: i32) -> (i32, i32) {
    %c0_i32 = arith.constant 0 : i32
    %c0_i32_0 = arith.constant 0 : i32
    %c0_i32_1 = arith.constant 0 : i32
    return %c0_i32, %c0_i32_0 : i32, i32
  }
  func.func @transform_6(%arg0: i32) -> (i32, i32) {
    %c0_i32 = arith.constant 0 : i32
    %c0_i32_0 = arith.constant 0 : i32
    %c0_i32_1 = arith.constant 0 : i32
    return %c0_i32, %c0_i32_0 : i32, i32
  }
  func.func @transform_7(%arg0: i32) -> (i32, i32) {
    %c0_i32 = arith.constant 0 : i32
    %c0_i32_0 = arith.constant 0 : i32
    %c0_i32_1 = arith.constant 0 : i32
    return %c0_i32, %c0_i32_0 : i32, i32
  }
  func.func @transform_8(%arg0: i32) -> (i32, i32) {
    %c0_i32 = arith.constant 0 : i32
    %c0_i32_0 = arith.constant 0 : i32
    %c0_i32_1 = arith.constant 0 : i32
    return %c0_i32, %c0_i32_0 : i32, i32
  }
  func.func @transform_9(%arg0: i32) -> (i32, i32) {
    %c0_i32 = arith.constant 0 : i32
    %c0_i32_0 = arith.constant 0 : i32
    return %arg0, %c0_i32 : i32, i32
  }
  func.func @transform_10(%arg0: i32) -> (i32, i32) {
    %c0_i32 = arith.constant 0 : i32
    %c0_i32_0 = arith.constant 0 : i32
    return %arg0, %c0_i32 : i32, i32
  }
  func.func @transform_11(%arg0: i32) -> (i32, i32, i32) {
    %c0_i32 = arith.constant 0 : i32
    %c0_i32_0 = arith.constant 0 : i32
    %c0_i32_1 = arith.constant 0 : i32
    return %arg0, %c0_i32, %c0_i32_0 : i32, i32, i32
  }
}

</mosaic_0001>

<llo_original>
// kernel: tpu_custom_call.1
$region0: #{tpu_custom_call.1}
  #allocation0 [shape = 'u32[]', space=smem, size = 0x4, offset = 0x4, fixed_abs, tag = 'smem constant byte address 0x4 - core index']
  #allocation1 [shape = 'u32[144,128]{1,0:T(1,128)}', space=vmem, size = 0x12000, scoped, tag = 'internal scratch']
  %s0 = inlined_call_operand.hbm [shape: f32[8,128], index: 0, kind: input, shape index: {}]
  %s1 = inlined_call_operand.hbm [shape: f32[128,128], index: 1, kind: input, shape index: {}]
  %s2 = inlined_call_operand.vmem [shape: f32[1,128], index: 2, kind: input, shape index: {}]
  %s3 = inlined_call_operand.hbm [shape: f32[128,256], index: 3, kind: input, shape index: {}]
  %s4 = inlined_call_operand.vmem [shape: f32[1,256], index: 4, kind: input, shape index: {}]
  %s5 = inlined_call_operand.hbm [shape: f32[128,128], index: 5, kind: input, shape index: {}]
  %s6 = inlined_call_operand.vmem [shape: f32[1,128], index: 6, kind: input, shape index: {}]
  %s7 = inlined_call_operand.hbm [shape: f32[128,128], index: 7, kind: input, shape index: {}]
  %s8 = inlined_call_operand.vmem [shape: f32[1,128], index: 8, kind: input, shape index: {}]
  %s9 = inlined_call_operand.vmem [shape: f32[8,128], index: 9, kind: input, shape index: {}]
  %s10 = inlined_call_operand.hbm [shape: f32[8,128], index: 10, kind: output, shape index: {0}]
  %s11 = inlined_call_operand.hbm [shape: f32[1,1,1], index: 11, kind: output, shape index: {1}]
  %12 = xla_tuple %s10, %s11
  %s13 = sld [smem:[#allocation0]]
  $region78: #{tpu_custom_call.1} parent=0
    _
  %s15 = ssub.s32 1, %s13
  %s16 = scalar_select 0, %s15, %s13
  $region1: #{tpu_custom_call.1} parent=0
    #allocation2 [shape = 'u8[4096]{0}', space=vmem, size = 0x1000, scoped, tag = 'input window, operand 0, single buffered']
    #allocation3 [shape = 's32[1]{0}', space=sflag, size = 0x4, scoped, tag = 'scoped memory for tpu_custom_call.1']
    #allocation4 [shape = 's32[1]{0}', space=sflag, size = 0x4, scoped, tag = 'scoped memory for tpu_custom_call.1']
    #allocation5 [shape = 'u8[65536]{0}', space=vmem, size = 0x10000, scoped, tag = 'input window, operand 1, single buffered']
    #allocation6 [shape = 's32[1]{0}', space=sflag, size = 0x4, scoped, tag = 'scoped memory for tpu_custom_call.1']
    #allocation7 [shape = 'u8[131072]{0}', space=vmem, size = 0x20000, scoped, tag = 'input window, operand 3, single buffered']
    #allocation8 [shape = 'u8[65536]{0}', space=vmem, size = 0x10000, scoped, tag = 'input window, operand 5, single buffered']
    #allocation9 [shape = 's32[1]{0}', space=sflag, size = 0x4, scoped, tag = 'scoped memory for tpu_custom_call.1']
    #allocation10 [shape = 'u8[65536]{0}', space=vmem, size = 0x10000, scoped, tag = 'input window, operand 7, single buffered']
    #allocation11 [shape = 'u8[4096]{0}', space=vmem, size = 0x1000, scoped, tag = 'output window, operand 0, single buffered']
    #allocation12 [shape = 'u8[512]{0}', space=vmem, size = 0x400, scoped, tag = 'output window, operand 1, single buffered']
    #allocation13 [shape = 's32[1]{0}', space=sflag, size = 0x4, scoped, tag = 'scoped memory for tpu_custom_call.1']
    %17 = vsyncpa [#allocation3], 0
    %18 = vsyncpa [#allocation6], 0
    %19 = vsyncpa [#allocation9], 0
    %20 = vsyncpa [#allocation4], 0
    %21 = vsyncpa [#allocation13], 0
    // Predicated region
    $region2: #{tpu_custom_call.1} parent=1 // pred_check
      _
    $region3: #{tpu_custom_call.1} parent=1 // pred_check_branch
      %23 = sbr.rel (0) target = $region5
    $region4: #{tpu_custom_call.1} parent=1 // pred_region
      %s25 = ssub.s32 128, 128
      %26 = vsyncadd [#allocation3], %s25
      %s28 = sshll.u32 [#allocation2], 4
      %s29 = int_to_ptr.vmem [resolvable:$true] %s28
      %31 = dma.hbm_to_vmem [thread:$0]  %s0, 128, %s29, [#allocation3]
    $region5: #{tpu_custom_call.1} parent=1 // pred_fallthru
      _
    // Predicated region
    $region6: #{tpu_custom_call.1} parent=1 // pred_check
      _
    $region7: #{tpu_custom_call.1} parent=1 // pred_check_branch
      %33 = sbr.rel (0) target = $region9
    $region8: #{tpu_custom_call.1} parent=1 // pred_region
      %s35 = ssub.s32 2048, 2048
      %36 = vsyncadd [#allocation6], %s35
      %s37 = sshll.u32 [#allocation5], 4
      %s38 = int_to_ptr.vmem [resolvable:$true] %s37
      %43 = dma.hbm_to_vmem [thread:$0]  %s1, 2048, %s38, [#allocation6], 128, 128, 8
    $region9: #{tpu_custom_call.1} parent=1 // pred_fallthru
      _
    // Predicated region
    $region10: #{tpu_custom_call.1} parent=1 // pred_check
      _
    $region11: #{tpu_custom_call.1} parent=1 // pred_check_branch
      %45 = sbr.rel (0) target = $region13
    $region12: #{tpu_custom_call.1} parent=1 // pred_region
      _
    $region13: #{tpu_custom_call.1} parent=1 // pred_fallthru
      _
    // Predicated region
    $region14: #{tpu_custom_call.1} parent=1 // pred_check
      _
    $region15: #{tpu_custom_call.1} parent=1 // pred_check_branch
      %47 = sbr.rel (0) target = $region17
    $region16: #{tpu_custom_call.1} parent=1 // pred_region
      %s49 = ssub.s32 4096, 4096
      %50 = vsyncadd [#allocation6], %s49
      %s51 = sshll.u32 [#allocation7], 4
      %s52 = int_to_ptr.vmem [resolvable:$true] %s51
      %57 = dma.hbm_to_vmem [thread:$0]  %s3, 4096, %s52, [#allocation6], 256, 256, 16
    $region17: #{tpu_custom_call.1} parent=1 // pred_fallthru
      _
    // Predicated region
    $region18: #{tpu_custom_call.1} parent=1 // pred_check
      _
    $region19: #{tpu_custom_call.1} parent=1 // pred_check_branch
      %59 = sbr.rel (0) target = $region21
    $region20: #{tpu_custom_call.1} parent=1 // pred_region
      _
    $region21: #{tpu_custom_call.1} parent=1 // pred_fallthru
      _
    // Predicated region
    $region22: #{tpu_custom_call.1} parent=1 // pred_check
      _
    $region23: #{tpu_custom_call.1} parent=1 // pred_check_branch
      %61 = sbr.rel (0) target = $region25
    $region24: #{tpu_custom_call.1} parent=1 // pred_region
      %s63 = ssub.s32 2048, 2048
      %64 = vsyncadd [#allocation9], %s63
      %s65 = sshll.u32 [#allocation8], 4
      %s66 = int_to_ptr.vmem [resolvable:$true] %s65
      %71 = dma.hbm_to_vmem [thread:$0]  %s5, 2048, %s66, [#allocation9], 128, 128, 8
    $region25: #{tpu_custom_call.1} parent=1 // pred_fallthru
      _
    // Predicated region
    $region26: #{tpu_custom_call.1} parent=1 // pred_check
      _
    $region27: #{tpu_custom_call.1} parent=1 // pred_check_branch
      %73 = sbr.rel (0) target = $region29
    $region28: #{tpu_custom_call.1} parent=1 // pred_region
      _
    $region29: #{tpu_custom_call.1} parent=1 // pred_fallthru
      _
    // Predicated region
    $region30: #{tpu_custom_call.1} parent=1 // pred_check
      _
    $region31: #{tpu_custom_call.1} parent=1 // pred_check_branch
      %75 = sbr.rel (0) target = $region33
    $region32: #{tpu_custom_call.1} parent=1 // pred_region
      %s77 = ssub.s32 2048, 2048
      %78 = vsyncadd [#allocation9], %s77
      %s79 = sshll.u32 [#allocation10], 4
      %s80 = int_to_ptr.vmem [resolvable:$true] %s79
      %85 = dma.hbm_to_vmem [thread:$0]  %s7, 2048, %s80, [#allocation9], 128, 128, 8
    $region33: #{tpu_custom_call.1} parent=1 // pred_fallthru
      _
    // Predicated region
    $region34: #{tpu_custom_call.1} parent=1 // pred_check
      _
    $region35: #{tpu_custom_call.1} parent=1 // pred_check_branch
      %87 = sbr.rel (0) target = $region37
    $region36: #{tpu_custom_call.1} parent=1 // pred_region
      _
    $region37: #{tpu_custom_call.1} parent=1 // pred_fallthru
      _
    // Predicated region
    $region38: #{tpu_custom_call.1} parent=1 // pred_check
      _
    $region39: #{tpu_custom_call.1} parent=1 // pred_check_branch
      %89 = sbr.rel (0) target = $region41
    $region40: #{tpu_custom_call.1} parent=1 // pred_region
      _
    $region41: #{tpu_custom_call.1} parent=1 // pred_fallthru
      _
    // Predicated region
    $region42: #{tpu_custom_call.1} parent=1 // pred_check
      _
    $region43: #{tpu_custom_call.1} parent=1 // pred_check_branch
      %91 = sbr.rel (0) target = $region45
    $region44: #{tpu_custom_call.1} parent=1 // pred_region
      %92 = dma.done [#allocation3], 128
    $region45: #{tpu_custom_call.1} parent=1 // pred_fallthru
      _
    // Predicated region
    $region46: #{tpu_custom_call.1} parent=1 // pred_check
      _
    $region47: #{tpu_custom_call.1} parent=1 // pred_check_branch
      %94 = sbr.rel (0) target = $region49
    $region48: #{tpu_custom_call.1} parent=1 // pred_region
      %95 = dma.done [#allocation6], 2048
    $region49: #{tpu_custom_call.1} parent=1 // pred_fallthru
      _
    // Predicated region
    $region50: #{tpu_custom_call.1} parent=1 // pred_check
      _
    $region51: #{tpu_custom_call.1} parent=1 // pred_check_branch
      %97 = sbr.rel (0) target = $region53
    $region52: #{tpu_custom_call.1} parent=1 // pred_region
      %98 = dma.done [#allocation6], 4096
    $region53: #{tpu_custom_call.1} parent=1 // pred_fallthru
      _
    // Predicated region
    $region54: #{tpu_custom_call.1} parent=1 // pred_check
      _
    $region55: #{tpu_custom_call.1} parent=1 // pred_check_branch
      %100 = sbr.rel (0) target = $region57
    $region56: #{tpu_custom_call.1} parent=1 // pred_region
      %101 = dma.done [#allocation9], 2048
    $region57: #{tpu_custom_call.1} parent=1 // pred_fallthru
      _
    // Predicated region
    $region58: #{tpu_custom_call.1} parent=1 // pred_check
      _
    $region59: #{tpu_custom_call.1} parent=1 // pred_check_branch
      %103 = sbr.rel (0) target = $region61
    $region60: #{tpu_custom_call.1} parent=1 // pred_region
      %104 = dma.done [#allocation9], 2048
    $region61: #{tpu_custom_call.1} parent=1 // pred_fallthru
      _
    %v105 = vld [vmem:[#allocation2] sm:$0xff]
    %v106 = vld [vmem:[#allocation5] sm:$0xff]
    %v107 = vld [vmem:[#allocation5 + $0x8] sm:$0xff]
    %v108 = vld [vmem:[#allocation5 + $0x10] sm:$0xff]
    %v109 = vld [vmem:[#allocation5 + $0x18] sm:$0xff]
    %v110 = vld [vmem:[#allocation5 + $0x20] sm:$0xff]
    %v111 = vld [vmem:[#allocation5 + $0x28] sm:$0xff]
    %v112 = vld [vmem:[#allocation5 + $0x30] sm:$0xff]
    %v113 = vld [vmem:[#allocation5 + $0x38] sm:$0xff]
    %v114 = vld [vmem:[#allocation5 + $0x40] sm:$0xff]
    %v115 = vld [vmem:[#allocation5 + $0x48] sm:$0xff]
    %v116 = vld [vmem:[#allocation5 + $0x50] sm:$0xff]
    %v117 = vld [vmem:[#allocation5 + $0x58] sm:$0xff]
    %v118 = vld [vmem:[#allocation5 + $0x60] sm:$0xff]
    %v119 = vld [vmem:[#allocation5 + $0x68] sm:$0xff]
    %v120 = vld [vmem:[#allocation5 + $0x70] sm:$0xff]
    %v121 = vld [vmem:[#allocation5 + $0x78] sm:$0xff]
    %v122 = vld [vmem:[%s2] sm:$0x1]
    %v124 = vlaneseq
    %v125 = vshrl.u32 %v124, 7
    %v126 = vsub.s32 0, %v125
    %v127 = vrot.slane %v122, %v126
    %129 = vmatprep.subr.mxu0 0.0
    %130 = vmatpush1.msra.mxu0 %v106
    %131 = vmatprep.subr.mxu0 0.0
    %132 = vmatpush1.msra.mxu0 %v107
    %133 = vmatprep.subr.mxu0 0.0
    %134 = vmatpush1.msra.mxu0 %v108
    %135 = vmatprep.subr.mxu0 0.0
    %136 = vmatpush1.msra.mxu0 %v109
    %137 = vmatprep.subr.mxu0 0.0
    %138 = vmatpush1.msra.mxu0 %v110
    %139 = vmatprep.subr.mxu0 0.0
    %140 = vmatpush1.msra.mxu0 %v111
    %141 = vmatprep.subr.mxu0 0.0
    %142 = vmatpush1.msra.mxu0 %v112
    %143 = vmatprep.subr.mxu0 0.0
    %144 = vmatpush1.msra.mxu0 %v113
    %145 = vmatprep.subr.mxu0 0.0
    %146 = vmatpush1.msra.mxu0 %v114
    %147 = vmatprep.subr.mxu0 0.0
    %148 = vmatpush1.msra.mxu0 %v115
    %149 = vmatprep.subr.mxu0 0.0
    %150 = vmatpush1.msra.mxu0 %v116
    %151 = vmatprep.subr.mxu0 0.0
    %152 = vmatpush1.msra.mxu0 %v117
    %153 = vmatprep.subr.mxu0 0.0
    %154 = vmatpush1.msra.mxu0 %v118
    %155 = vmatprep.subr.mxu0 0.0
    %156 = vmatpush1.msra.mxu0 %v119
    %157 = vmatprep.subr.mxu0 0.0
    %158 = vmatpush1.msra.mxu0 %v120
    %159 = vmatprep.subr.mxu0 0.0
    %160 = vmatpush1.msra.mxu0 %v121
    %161 = vmatprep.subr.mxu0 0.0
    %162 = vmatpush1.msra.mxu0 0.0
    %163 = vmatprep.subr.mxu0 0.0
    %164 = vmatpush1.msra.mxu0 0.0
    %165 = vmatprep.subr.mxu0 0.0
    %166 = vmatpush1.msra.mxu0 0.0
    %167 = vmatprep.subr.mxu0 0.0
    %168 = vmatpush1.msra.mxu0 0.0
    %169 = vmatprep.subr.mxu0 0.0
    %170 = vmatpush1.msra.mxu0 0.0
    %171 = vmatprep.subr.mxu0 0.0
    %172 = vmatpush1.msra.mxu0 0.0
    %173 = vmatprep.subr.mxu0 0.0
    %174 = vmatpush1.msra.mxu0 0.0
    %175 = vmatprep.subr.mxu0 0.0
    %176 = vmatpush1.msra.mxu0 0.0
    %177 = vmatprep.subr.mxu0 0.0
    %178 = vmatpush1.msra.mxu0 0.0
    %179 = vmatprep.subr.mxu0 0.0
    %180 = vmatpush1.msra.mxu0 0.0
    %181 = vmatprep.subr.mxu0 0.0
    %182 = vmatpush1.msra.mxu0 0.0
    %183 = vmatprep.subr.mxu0 0.0
    %184 = vmatpush1.msra.mxu0 0.0
    %185 = vmatprep.subr.mxu0 0.0
    %186 = vmatpush1.msra.mxu0 0.0
    %187 = vmatprep.subr.mxu0 0.0
    %188 = vmatpush1.msra.mxu0 0.0
    %189 = vmatprep.subr.mxu0 0.0
    %190 = vmatpush1.msra.mxu0 0.0
    %191 = vmatprep.subr.mxu0 0.0
    %192 = vmatpush1.msra.mxu0 0.0
    %193 = vmatprep.mubr.f32.mxu0 0.0
    %194 = vmatmul.mubr.f32.gmra.mrb[0].mxu0 %v105
    %v195 = vpop.f32.mrb[0].mxu0
    %v196 = vadd.f32 %v127, %v195
    %v197 = vpop.f32.mrb[0].mxu0
    %198 = vdwg.mxu0
    %v199 = vmax.f32 %v196, 0.0
    %v200 = vld [vmem:[#allocation7] sm:$0xff]
    %v201 = vld [vmem:[#allocation7 + $0x8] sm:$0xff]
    %v202 = vld [vmem:[#allocation7 + $0x10] sm:$0xff]
    %v203 = vld [vmem:[#allocation7 + $0x18] sm:$0xff]
    %v204 = vld [vmem:[#allocation7 + $0x20] sm:$0xff]
    %v205 = vld [vmem:[#allocation7 + $0x28] sm:$0xff]
    %v206 = vld [vmem:[#allocation7 + $0x30] sm:$0xff]
    %v207 = vld [vmem:[#allocation7 + $0x38] sm:$0xff]
    %v208 = vld [vmem:[#allocation7 + $0x40] sm:$0xff]
    %v209 = vld [vmem:[#allocation7 + $0x48] sm:$0xff]
    %v210 = vld [vmem:[#allocation7 + $0x50] sm:$0xff]
    %v211 = vld [vmem:[#allocation7 + $0x58] sm:$0xff]
    %v212 = vld [vmem:[#allocation7 + $0x60] sm:$0xff]
    %v213 = vld [vmem:[#allocation7 + $0x68] sm:$0xff]
    %v214 = vld [vmem:[#allocation7 + $0x70] sm:$0xff]
    %v215 = vld [vmem:[#allocation7 + $0x78] sm:$0xff]
    %v216 = vld [vmem:[#allocation7 + $0x80] sm:$0xff]
    %v217 = vld [vmem:[#allocation7 + $0x88] sm:$0xff]
    %v218 = vld [vmem:[#allocation7 + $0x90] sm:$0xff]
    %v219 = vld [vmem:[#allocation7 + $0x98] sm:$0xff]
    %v220 = vld [vmem:[#allocation7 + $0xa0] sm:$0xff]
    %v221 = vld [vmem:[#allocation7 + $0xa8] sm:$0xff]
    %v222 = vld [vmem:[#allocation7 + $0xb0] sm:$0xff]
    %v223 = vld [vmem:[#allocation7 + $0xb8] sm:$0xff]
    %v224 = vld [vmem:[#allocation7 + $0xc0] sm:$0xff]
    %v225 = vld [vmem:[#allocation7 + $0xc8] sm:$0xff]
    %v226 = vld [vmem:[#allocation7 + $0xd0] sm:$0xff]
    %v227 = vld [vmem:[#allocation7 + $0xd8] sm:$0xff]
    %v228 = vld [vmem:[#allocation7 + $0xe0] sm:$0xff]
    %v229 = vld [vmem:[#allocation7 + $0xe8] sm:$0xff]
    %v230 = vld [vmem:[#allocation7 + $0xf0] sm:$0xff]
    %v231 = vld [vmem:[#allocation7 + $0xf8] sm:$0xff]
    %v232 = vld [vmem:[%s4] sm:$0x3]
    %v234 = vlaneseq
    %v235 = vshrl.u32 %v234, 7
    %v236 = vsub.s32 0, %v235
    %v237 = vrot.slane %v232, %v236
    %v238 = vlaneseq
    %v239 = vshrl.u32 %v238, 7
    %v240 = vsub.s32 1, %v239
    %v241 = vrot.slane %v232, %v240
    %244 = vmatprep.subr.mxu0 %v201
    %245 = vmatpush1.msra.mxu0 %v200
    %246 = vmatprep.subr.mxu0 %v203
    %247 = vmatpush1.msra.mxu0 %v202
    %248 = vmatprep.subr.mxu0 %v205
    %249 = vmatpush1.msra.mxu0 %v204
    %250 = vmatprep.subr.mxu0 %v207
    %251 = vmatpush1.msra.mxu0 %v206
    %252 = vmatprep.subr.mxu0 %v209
    %253 = vmatpush1.msra.mxu0 %v208
    %254 = vmatprep.subr.mxu0 %v211
    %255 = vmatpush1.msra.mxu0 %v210
    %256 = vmatprep.subr.mxu0 %v213
    %257 = vmatpush1.msra.mxu0 %v212
    %258 = vmatprep.subr.mxu0 %v215
    %259 = vmatpush1.msra.mxu0 %v214
    %260 = vmatprep.subr.mxu0 %v217
    %261 = vmatpush1.msra.mxu0 %v216
    %262 = vmatprep.subr.mxu0 %v219
    %263 = vmatpush1.msra.mxu0 %v218
    %264 = vmatprep.subr.mxu0 %v221
    %265 = vmatpush1.msra.mxu0 %v220
    %266 = vmatprep.subr.mxu0 %v223
    %267 = vmatpush1.msra.mxu0 %v222
    %268 = vmatprep.subr.mxu0 %v225
    %269 = vmatpush1.msra.mxu0 %v224
    %270 = vmatprep.subr.mxu0 %v227
    %271 = vmatpush1.msra.mxu0 %v226
    %272 = vmatprep.subr.mxu0 %v229
    %273 = vmatpush1.msra.mxu0 %v228
    %274 = vmatprep.subr.mxu0 %v231
    %275 = vmatpush1.msra.mxu0 %v230
    %276 = vmatprep.subr.mxu0 0.0
    %277 = vmatpush1.msra.mxu0 0.0
    %278 = vmatprep.subr.mxu0 0.0
    %279 = vmatpush1.msra.mxu0 0.0
    %280 = vmatprep.subr.mxu0 0.0
    %281 = vmatpush1.msra.mxu0 0.0
    %282 = vmatprep.subr.mxu0 0.0
    %283 = vmatpush1.msra.mxu0 0.0
    %284 = vmatprep.subr.mxu0 0.0
    %285 = vmatpush1.msra.mxu0 0.0
    %286 = vmatprep.subr.mxu0 0.0
    %287 = vmatpush1.msra.mxu0 0.0
    %288 = vmatprep.subr.mxu0 0.0
    %289 = vmatpush1.msra.mxu0 0.0
    %290 = vmatprep.subr.mxu0 0.0
    %291 = vmatpush1.msra.mxu0 0.0
    %292 = vmatprep.subr.mxu0 0.0
    %293 = vmatpush1.msra.mxu0 0.0
    %294 = vmatprep.subr.mxu0 0.0
    %295 = vmatpush1.msra.mxu0 0.0
    %296 = vmatprep.subr.mxu0 0.0
    %297 = vmatpush1.msra.mxu0 0.0
    %298 = vmatprep.subr.mxu0 0.0
    %299 = vmatpush1.msra.mxu0 0.0
    %300 = vmatprep.subr.mxu0 0.0
    %301 = vmatpush1.msra.mxu0 0.0
    %302 = vmatprep.subr.mxu0 0.0
    %303 = vmatpush1.msra.mxu0 0.0
    %304 = vmatprep.subr.mxu0 0.0
    %305 = vmatpush1.msra.mxu0 0.0
    %306 = vmatprep.subr.mxu0 0.0
    %307 = vmatpush1.msra.mxu0 0.0
    %308 = vmatprep.mubr.f32.mxu0 0.0
    %309 = vmatmul.mubr.f32.gmra.mrb[0].mxu0 %v199
    %v310 = vpop.f32.mrb[0].mxu0
    %v311 = vadd.f32 %v237, %v310
    %v312 = vpop.f32.mrb[0].mxu0
    %v313 = vadd.f32 %v241, %v312
    %314 = vdwg.mxu0
    %v315 = vmul.f32 %v313, 1.442695
    %v316 = vpow.pop %v315
    %v317 = vld [vmem:[%s9] sm:$0xff]
    %v318 = vmul.f32 %v316, %v317
    %v319 = vadd.f32 %v311, %v318
    %v320 = vmul.f32 %v316, %v316
    %v321 = vmul.f32 %v311, %v311
    %v322 = vadd.f32 %v320, %v321
    %v323 = vmul.f32 %v313, 2.0
    %v324 = vsub.f32 %v322, %v323
    %v325 = vsub.f32 %v324, 1.0
    %326 = vadd.xlane.f32.xlu0 %v325
    %v327 = vpop.xlane.xlu0 %326
    %v328 = vrot.slane %v327, 4
    %v329 = vadd.f32 %v327, %v328
    %v330 = vrot.slane %v329, 2
    %v331 = vadd.f32 %v329, %v330
    %v332 = vrot.slane %v331, 1
    %v333 = vadd.f32 %v331, %v332
    %vm334 = vcmask 0
    %335 = vst.msk [vmem:[#allocation12] sm:$0x1] %vm334, %v333
    %v336 = vld [vmem:[#allocation8] sm:$0xff]
    %v337 = vld [vmem:[#allocation8 + $0x8] sm:$0xff]
    %v338 = vld [vmem:[#allocation8 + $0x10] sm:$0xff]
    %v339 = vld [vmem:[#allocation8 + $0x18] sm:$0xff]
    %v340 = vld [vmem:[#allocation8 + $0x20] sm:$0xff]
    %v341 = vld [vmem:[#allocation8 + $0x28] sm:$0xff]
    %v342 = vld [vmem:[#allocation8 + $0x30] sm:$0xff]
    %v343 = vld [vmem:[#allocation8 + $0x38] sm:$0xff]
    %v344 = vld [vmem:[#allocation8 + $0x40] sm:$0xff]
    %v345 = vld [vmem:[#allocation8 + $0x48] sm:$0xff]
    %v346 = vld [vmem:[#allocation8 + $0x50] sm:$0xff]
    %v347 = vld [vmem:[#allocation8 + $0x58] sm:$0xff]
    %v348 = vld [vmem:[#allocation8 + $0x60] sm:$0xff]
    %v349 = vld [vmem:[#allocation8 + $0x68] sm:$0xff]
    %v350 = vld [vmem:[#allocation8 + $0x70] sm:$0xff]
    %v351 = vld [vmem:[#allocation8 + $0x78] sm:$0xff]
    %v352 = vld [vmem:[%s6] sm:$0x1]
    %v354 = vlaneseq
    %v355 = vshrl.u32 %v354, 7
    %v356 = vsub.s32 0, %v355
    %v357 = vrot.slane %v352, %v356
    %359 = vmatprep.subr.mxu0 0.0
    %360 = vmatpush1.msra.mxu0 %v336
    %361 = vmatprep.subr.mxu0 0.0
    %362 = vmatpush1.msra.mxu0 %v337
    %363 = vmatprep.subr.mxu0 0.0
    %364 = vmatpush1.msra.mxu0 %v338
    %365 = vmatprep.subr.mxu0 0.0
    %366 = vmatpush1.msra.mxu0 %v339
    %367 = vmatprep.subr.mxu0 0.0
    %368 = vmatpush1.msra.mxu0 %v340
    %369 = vmatprep.subr.mxu0 0.0
    %370 = vmatpush1.msra.mxu0 %v341
    %371 = vmatprep.subr.mxu0 0.0
    %372 = vmatpush1.msra.mxu0 %v342
    %373 = vmatprep.subr.mxu0 0.0
    %374 = vmatpush1.msra.mxu0 %v343
    %375 = vmatprep.subr.mxu0 0.0
    %376 = vmatpush1.msra.mxu0 %v344
    %377 = vmatprep.subr.mxu0 0.0
    %378 = vmatpush1.msra.mxu0 %v345
    %379 = vmatprep.subr.mxu0 0.0
    %380 = vmatpush1.msra.mxu0 %v346
    %381 = vmatprep.subr.mxu0 0.0
    %382 = vmatpush1.msra.mxu0 %v347
    %383 = vmatprep.subr.mxu0 0.0
    %384 = vmatpush1.msra.mxu0 %v348
    %385 = vmatprep.subr.mxu0 0.0
    %386 = vmatpush1.msra.mxu0 %v349
    %387 = vmatprep.subr.mxu0 0.0
    %388 = vmatpush1.msra.mxu0 %v350
    %389 = vmatprep.subr.mxu0 0.0
    %390 = vmatpush1.msra.mxu0 %v351
    %391 = vmatprep.subr.mxu0 0.0
    %392 = vmatpush1.msra.mxu0 0.0
    %393 = vmatprep.subr.mxu0 0.0
    %394 = vmatpush1.msra.mxu0 0.0
    %395 = vmatprep.subr.mxu0 0.0
    %396 = vmatpush1.msra.mxu0 0.0
    %397 = vmatprep.subr.mxu0 0.0
    %398 = vmatpush1.msra.mxu0 0.0
    %399 = vmatprep.subr.mxu0 0.0
    %400 = vmatpush1.msra.mxu0 0.0
    %401 = vmatprep.subr.mxu0 0.0
    %402 = vmatpush1.msra.mxu0 0.0
    %403 = vmatprep.subr.mxu0 0.0
    %404 = vmatpush1.msra.mxu0 0.0
    %405 = vmatprep.subr.mxu0 0.0
    %406 = vmatpush1.msra.mxu0 0.0
    %407 = vmatprep.subr.mxu0 0.0
    %408 = vmatpush1.msra.mxu0 0.0
    %409 = vmatprep.subr.mxu0 0.0
    %410 = vmatpush1.msra.mxu0 0.0
    %411 = vmatprep.subr.mxu0 0.0
    %412 = vmatpush1.msra.mxu0 0.0
    %413 = vmatprep.subr.mxu0 0.0
    %414 = vmatpush1.msra.mxu0 0.0
    %415 = vmatprep.subr.mxu0 0.0
    %416 = vmatpush1.msra.mxu0 0.0
    %417 = vmatprep.subr.mxu0 0.0
    %418 = vmatpush1.msra.mxu0 0.0
    %419 = vmatprep.subr.mxu0 0.0
    %420 = vmatpush1.msra.mxu0 0.0
    %421 = vmatprep.subr.mxu0 0.0
    %422 = vmatpush1.msra.mxu0 0.0
    %423 = vmatprep.mubr.f32.mxu0 0.0
    %424 = vmatmul.mubr.f32.gmra.mrb[0].mxu0 %v319
    %v425 = vpop.f32.mrb[0].mxu0
    %v426 = vadd.f32 %v357, %v425
    %v427 = vpop.f32.mrb[0].mxu0
    %428 = vdwg.mxu0
    %v429 = vmax.f32 %v426, 0.0
    %v430 = vld [vmem:[#allocation10] sm:$0xff]
    %v431 = vld [vmem:[#allocation10 + $0x8] sm:$0xff]
    %v432 = vld [vmem:[#allocation10 + $0x10] sm:$0xff]
    %v433 = vld [vmem:[#allocation10 + $0x18] sm:$0xff]
    %v434 = vld [vmem:[#allocation10 + $0x20] sm:$0xff]
    %v435 = vld [vmem:[#allocation10 + $0x28] sm:$0xff]
    %v436 = vld [vmem:[#allocation10 + $0x30] sm:$0xff]
    %v437 = vld [vmem:[#allocation10 + $0x38] sm:$0xff]
    %v438 = vld [vmem:[#allocation10 + $0x40] sm:$0xff]
    %v439 = vld [vmem:[#allocation10 + $0x48] sm:$0xff]
    %v440 = vld [vmem:[#allocation10 + $0x50] sm:$0xff]
    %v441 = vld [vmem:[#allocation10 + $0x58] sm:$0xff]
    %v442 = vld [vmem:[#allocation10 + $0x60] sm:$0xff]
    %v443 = vld [vmem:[#allocation10 + $0x68] sm:$0xff]
    %v444 = vld [vmem:[#allocation10 + $0x70] sm:$0xff]
    %v445 = vld [vmem:[#allocation10 + $0x78] sm:$0xff]
    %v446 = vld [vmem:[%s8] sm:$0x1]
    %v448 = vlaneseq
    %v449 = vshrl.u32 %v448, 7
    %v450 = vsub.s32 0, %v449
    %v451 = vrot.slane %v446, %v450
    %453 = vmatprep.subr.mxu0 0.0
    %454 = vmatpush1.msra.mxu0 %v430
    %455 = vmatprep.subr.mxu0 0.0
    %456 = vmatpush1.msra.mxu0 %v431
    %457 = vmatprep.subr.mxu0 0.0
    %458 = vmatpush1.msra.mxu0 %v432
    %459 = vmatprep.subr.mxu0 0.0
    %460 = vmatpush1.msra.mxu0 %v433
    %461 = vmatprep.subr.mxu0 0.0
    %462 = vmatpush1.msra.mxu0 %v434
    %463 = vmatprep.subr.mxu0 0.0
    %464 = vmatpush1.msra.mxu0 %v435
    %465 = vmatprep.subr.mxu0 0.0
    %466 = vmatpush1.msra.mxu0 %v436
    %467 = vmatprep.subr.mxu0 0.0
    %468 = vmatpush1.msra.mxu0 %v437
    %469 = vmatprep.subr.mxu0 0.0
    %470 = vmatpush1.msra.mxu0 %v438
    %471 = vmatprep.subr.mxu0 0.0
    %472 = vmatpush1.msra.mxu0 %v439
    %473 = vmatprep.subr.mxu0 0.0
    %474 = vmatpush1.msra.mxu0 %v440
    %475 = vmatprep.subr.mxu0 0.0
    %476 = vmatpush1.msra.mxu0 %v441
    %477 = vmatprep.subr.mxu0 0.0
    %478 = vmatpush1.msra.mxu0 %v442
    %479 = vmatprep.subr.mxu0 0.0
    %480 = vmatpush1.msra.mxu0 %v443
    %481 = vmatprep.subr.mxu0 0.0
    %482 = vmatpush1.msra.mxu0 %v444
    %483 = vmatprep.subr.mxu0 0.0
    %484 = vmatpush1.msra.mxu0 %v445
    %485 = vmatprep.subr.mxu0 0.0
    %486 = vmatpush1.msra.mxu0 0.0
    %487 = vmatprep.subr.mxu0 0.0
    %488 = vmatpush1.msra.mxu0 0.0
    %489 = vmatprep.subr.mxu0 0.0
    %490 = vmatpush1.msra.mxu0 0.0
    %491 = vmatprep.subr.mxu0 0.0
    %492 = vmatpush1.msra.mxu0 0.0
    %493 = vmatprep.subr.mxu0 0.0
    %494 = vmatpush1.msra.mxu0 0.0
    %495 = vmatprep.subr.mxu0 0.0
    %496 = vmatpush1.msra.mxu0 0.0
    %497 = vmatprep.subr.mxu0 0.0
    %498 = vmatpush1.msra.mxu0 0.0
    %499 = vmatprep.subr.mxu0 0.0
    %500 = vmatpush1.msra.mxu0 0.0
    %501 = vmatprep.subr.mxu0 0.0
    %502 = vmatpush1.msra.mxu0 0.0
    %503 = vmatprep.subr.mxu0 0.0
    %504 = vmatpush1.msra.mxu0 0.0
    %505 = vmatprep.subr.mxu0 0.0
    %506 = vmatpush1.msra.mxu0 0.0
    %507 = vmatprep.subr.mxu0 0.0
    %508 = vmatpush1.msra.mxu0 0.0
    %509 = vmatprep.subr.mxu0 0.0
    %510 = vmatpush1.msra.mxu0 0.0
    %511 = vmatprep.subr.mxu0 0.0
    %512 = vmatpush1.msra.mxu0 0.0
    %513 = vmatprep.subr.mxu0 0.0
    %514 = vmatpush1.msra.mxu0 0.0
    %515 = vmatprep.subr.mxu0 0.0
    %516 = vmatpush1.msra.mxu0 0.0
    %517 = vmatprep.mubr.f32.mxu0 0.0
    %518 = vmatmul.mubr.f32.gmra.mrb[0].mxu0 %v429
    %v519 = vpop.f32.mrb[0].mxu0
    %v520 = vadd.f32 %v451, %v519
    %v521 = vpop.f32.mrb[0].mxu0
    %522 = vdwg.mxu0
    %523 = vst [vmem:[#allocation11] sm:$0xff] %v520
    // Predicated region
    $region62: #{tpu_custom_call.1} parent=1 // pred_check
      _
    $region63: #{tpu_custom_call.1} parent=1 // pred_check_branch
      %525 = sbr.rel (0) target = $region65
    $region64: #{tpu_custom_call.1} parent=1 // pred_region
      %s527 = ssub.s32 128, 128
      %528 = vsyncadd [#allocation4], %s527
      %s530 = sshll.u32 [#allocation11], 4
      %s531 = int_to_ptr.vmem [resolvable:$true] %s530
      %533 = dma.vmem_to_hbm [thread:$0]  %s531, 128, %s10, [#allocation4]
    $region65: #{tpu_custom_call.1} parent=1 // pred_fallthru
      _
    // Predicated region
    $region66: #{tpu_custom_call.1} parent=1 // pred_check
      _
    $region67: #{tpu_custom_call.1} parent=1 // pred_check_branch
      %535 = sbr.rel (0) target = $region69
    $region68: #{tpu_custom_call.1} parent=1 // pred_region
      %s537 = ssub.s32 16, 16
      %538 = vsyncadd [#allocation13], %s537
      %s540 = sshll.u32 [#allocation12], 4
      %s541 = int_to_ptr.vmem [resolvable:$true] %s540
      %543 = dma.vmem_to_hbm [thread:$0]  %s541, 16, %s11, [#allocation13]
    $region69: #{tpu_custom_call.1} parent=1 // pred_fallthru
      _
    // Predicated region
    $region70: #{tpu_custom_call.1} parent=1 // pred_check
      _
    $region71: #{tpu_custom_call.1} parent=1 // pred_check_branch
      %545 = sbr.rel (0) target = $region73
    $region72: #{tpu_custom_call.1} parent=1 // pred_region
      %546 = dma.done [#allocation4], 128
    $region73: #{tpu_custom_call.1} parent=1 // pred_fallthru
      _
    // Predicated region
    $region74: #{tpu_custom_call.1} parent=1 // pred_check
      _
    $region75: #{tpu_custom_call.1} parent=1 // pred_check_branch
      %548 = sbr.rel (0) target = $region77
    $region76: #{tpu_custom_call.1} parent=1 // pred_region
      %549 = dma.done [#allocation13], 16
    $region77: #{tpu_custom_call.1} parent=1 // pred_fallthru
      _
    %550 = vsyncpa [#allocation3], 1
    %551 = vsyncpa [#allocation6], 1
    %552 = vsyncpa [#allocation9], 1
    %553 = vsyncpa [#allocation4], 1
    %554 = vsyncpa [#allocation13], 1

</llo_original>
